<compile_context>
chip_gen: v5e
topology: v5e:2x2
jax: 0.10.0
libtpu: 0.0.40
codegen_flags: <defaults>
</compile_context>

<pallas_src>
import jax
import jax.numpy as jnp
from jax.experimental import pallas as pl
from jax.experimental.pallas import tpu as pltpu

LANE = 128  # TPU lane width; pad the tiny label dim up to this for dense stores.


def _discriminator_kernel(x_ref, wT_ref, b_ref, o_ref):
    # x_ref:  (TILE_B, H)       VMEM  (per-grid-step batch tile)
    # wT_ref: (H, L_pad)        VMEM  (lane-padded, grid-invariant)
    # b_ref:  (1, L_pad)        VMEM  (lane-padded, grid-invariant)
    # o_ref:  (TILE_B, L_pad)   VMEM  (lane-dense output slab)
    #
    # GradientReversal and Dropout are identity on the forward path.
    # TODO(synk): training-mode dropout would use pltpu.prng_seed +
    # pltpu.prng_random_bits for the keep-mask; GRL only affects backward.
    acc = jnp.dot(x_ref[...], wT_ref[...], preferred_element_type=jnp.float32)
    o_ref[...] = (acc + b_ref[...]).astype(o_ref.dtype)


def prepare_discriminator_params(weight, bias, lane_pad=LANE):
    """One-time parameter prep (hoisted out of the per-call path).

    weight: [L, H] f32 (PyTorch nn.Linear layout); bias: [L] f32.
    Returns (wT_pad [H, lane_pad], b_pad [1, lane_pad]) with zero padding in
    the extra lanes, so padded output columns are exactly zero.
    """
    L, H = weight.shape
    wT_pad = jnp.zeros((H, lane_pad), dtype=weight.dtype).at[:, :L].set(weight.T)
    b_pad = jnp.zeros((1, lane_pad), dtype=bias.dtype).at[0, :L].set(bias)
    return wT_pad, b_pad


def discriminator_forward(data, wT_pad, b_pad, num_labels=1):
    """data: [B, H]; wT_pad: [H, L_pad]; b_pad: [1, L_pad]. Returns [B, num_labels]."""
    B, H = data.shape
    L_pad = wT_pad.shape[1]

    # Batch tile: big enough (when B is realistic) for DMA/compute overlap,
    # multiple of 8 sublanes, capped at 512 rows to stay well under VMEM on
    # v7x (2 * TILE_B * H * 4 bytes double-buffered + H*L_pad*4 + TILE_B*L_pad*4).
    tile_b = min(512, max(8, ((B + 7) // 8) * 8))
    b_pad_rows = pl.cdiv(B, tile_b) * tile_b
    if b_pad_rows != B:
        data = jnp.pad(data, ((0, b_pad_rows - B), (0, 0)))

    grid = (b_pad_rows // tile_b,)

    out = pl.pallas_call(
        _discriminator_kernel,
        out_shape=jax.ShapeDtypeStruct((b_pad_rows, L_pad), data.dtype),
        grid_spec=pltpu.PrefetchScalarGridSpec(
            num_scalar_prefetch=0,
            grid=grid,
            in_specs=[
                pl.BlockSpec((tile_b, H), lambda i: (i, 0)),   # batch-tiled x
                pl.BlockSpec((H, L_pad), lambda i: (0, 0)),    # invariant weight
                pl.BlockSpec((1, L_pad), lambda i: (0, 0)),    # invariant bias
            ],
            out_specs=pl.BlockSpec((tile_b, L_pad), lambda i: (i, 0)),
        ),
        compiler_params=pltpu.CompilerParams(
            dimension_semantics=("parallel",),  # shard batch tiles across TCs (v7x)
        ),
    )(data, wT_pad, b_pad)

    # Drop batch padding and the zero-padded lanes.
    return out[:B, :num_labels]


if __name__ == "__main__":
    # Small shapes consistent with the module: hidden_size=32, Linear(H, 1).
    batch = 8
    hidden_size = 32
    num_labels = 1
    initializer_range = 0.02

    key = jax.random.PRNGKey(0)
    k_data, k_w = jax.random.split(key)

    data = jax.random.normal(k_data, (batch, hidden_size), dtype=jnp.float32)

    # Deterministic parameter init mirroring _init_weights:
    #   weight ~ Normal(0, initializer_range), bias = 0
    weight = (initializer_range *
              jax.random.normal(k_w, (num_labels, hidden_size),
                                dtype=jnp.float32))
    bias = jnp.zeros((num_labels,), dtype=jnp.float32)

    # One-time parameter prep (would be done at model-load time in practice).
    wT_pad, b_pad = prepare_discriminator_params(weight, bias)

    out = discriminator_forward(data, wT_pad, b_pad, num_labels)
    out = jax.block_until_ready(out)

    # Sanity check against plain-JAX reference (GRL + eval-dropout = identity).
    ref = data @ weight.T + bias
    assert out.shape == (batch, num_labels)
    assert jnp.allclose(out, ref, atol=1e-5, rtol=1e-5)

    print("KERNEL_OK")
</pallas_src>

<mosaic_0001>
module attributes {stable_mosaic.version = 11 : i64} {
  func.func @_discriminator_kernel(%arg0: i32, %arg1: memref<8x32xf32, #tpu.memory_space<vmem>>, %arg2: memref<32x128xf32, #tpu.memory_space<vmem>>, %arg3: memref<1x128xf32, #tpu.memory_space<vmem>>, %arg4: memref<8x128xf32, #tpu.memory_space<vmem>>) attributes {dimension_semantics = [#tpu.dimension_semantics<parallel>], iteration_bounds = array<i64: 1>, scalar_prefetch = 0 : i64, scratch_operands = 0 : i64, tpu.core_type = #tpu.core_type<tc>, window_params = [{transform_indices = @transform_0, window_bounds = array<i64: 8, 32>}, {pipeline_mode = #tpu.pipeline_mode<synchronous>, transform_indices = @transform_1, window_bounds = array<i64: 32, 128>}, {pipeline_mode = #tpu.pipeline_mode<synchronous>, transform_indices = @transform_2, window_bounds = array<i64: 1, 128>}, {transform_indices = @transform_3, window_bounds = array<i64: 8, 128>}]} {
    %c0 = arith.constant 0 : index
    %c0_0 = arith.constant 0 : index
    %0 = vector.load %arg1[%c0, %c0_0] : memref<8x32xf32, #tpu.memory_space<vmem>>, vector<8x32xf32>
    %c0_1 = arith.constant 0 : index
    %c0_2 = arith.constant 0 : index
    %1 = vector.load %arg2[%c0_1, %c0_2] : memref<32x128xf32, #tpu.memory_space<vmem>>, vector<32x128xf32>
    %cst = arith.constant dense<0.000000e+00> : vector<8x128xf32>
    %2 = tpu.matmul %0, %1, %cst {dimension_numbers = #tpu.dot_dimension_numbers<[1], [0], [0], [1], [0, 0, 1, 1], [], []>} : vector<8x32xf32>, vector<32x128xf32>, vector<8x128xf32> -> vector<8x128xf32>
    %c0_3 = arith.constant 0 : index
    %c0_4 = arith.constant 0 : index
    %3 = vector.load %arg3[%c0_3, %c0_4] : memref<1x128xf32, #tpu.memory_space<vmem>>, vector<1x128xf32>
    %4 = vector.broadcast %3 : vector<1x128xf32> to vector<8x128xf32>
    %5 = arith.addf %2, %4 : vector<8x128xf32>
    %c0_5 = arith.constant 0 : index
    %c0_6 = arith.constant 0 : index
    %6 = vector.load %arg4[%c0_5, %c0_6] : memref<8x128xf32, #tpu.memory_space<vmem>>, vector<8x128xf32>
    tpu.vector_store %arg4[%c0_5, %c0_6], %5 {strides = array<i32>} : memref<8x128xf32, #tpu.memory_space<vmem>>, vector<8x128xf32>,
    return
  }
  func.func @transform_0(%arg0: i32) -> (i32, i32) {
    %c0_i32 = arith.constant 0 : i32
    %c0_i32_0 = arith.constant 0 : i32
    return %arg0, %c0_i32 : i32, i32
  }
  func.func @transform_1(%arg0: i32) -> (i32, i32) {
    %c0_i32 = arith.constant 0 : i32
    %c0_i32_0 = arith.constant 0 : i32
    %c0_i32_1 = arith.constant 0 : i32
    return %c0_i32, %c0_i32_0 : i32, i32
  }
  func.func @transform_2(%arg0: i32) -> (i32, i32) {
    %c0_i32 = arith.constant 0 : i32
    %c0_i32_0 = arith.constant 0 : i32
    %c0_i32_1 = arith.constant 0 : i32
    return %c0_i32, %c0_i32_0 : i32, i32
  }
  func.func @transform_3(%arg0: i32) -> (i32, i32) {
    %c0_i32 = arith.constant 0 : i32
    %c0_i32_0 = arith.constant 0 : i32
    return %arg0, %c0_i32 : i32, i32
  }
}

</mosaic_0001>

<llo_original>
// kernel: tpu_custom_call.1
$region0: #{tpu_custom_call.1}
  #allocation0 [shape = 'u32[]', space=smem, size = 0x4, offset = 0x4, fixed_abs, tag = 'smem constant byte address 0x4 - core index']
  #allocation1 [shape = 'u32[72,128]{1,0:T(1,128)}', space=vmem, size = 0x9000, scoped, tag = 'internal scratch']
  %s0 = inlined_call_operand.hbm [shape: f32[8,32], index: 0, kind: input, shape index: {}]
  %s1 = inlined_call_operand.hbm [shape: f32[32,128], index: 1, kind: input, shape index: {}]
  %s2 = inlined_call_operand.vmem [shape: f32[1,128], index: 2, kind: input, shape index: {}]
  %s3 = inlined_call_operand.hbm [shape: f32[8,128], index: 3, kind: output, shape index: {}]
  %s4 = sld [smem:[#allocation0]]
  $region30: #{tpu_custom_call.1} parent=0
    _
  %s6 = ssub.s32 1, %s4
  %s7 = scalar_select 0, %s6, %s4
  $region1: #{tpu_custom_call.1} parent=0
    #allocation2 [shape = 'u8[4096]{0}', space=vmem, size = 0x1000, scoped, tag = 'input window, operand 0, single buffered']
    #allocation3 [shape = 's32[1]{0}', space=sflag, size = 0x4, scoped, tag = 'scoped memory for tpu_custom_call.1']
    #allocation4 [shape = 's32[1]{0}', space=sflag, size = 0x4, scoped, tag = 'scoped memory for tpu_custom_call.1']
    #allocation5 [shape = 'u8[16384]{0}', space=vmem, size = 0x4000, scoped, tag = 'input window, operand 1, single buffered']
    #allocation6 [shape = 's32[1]{0}', space=sflag, size = 0x4, scoped, tag = 'scoped memory for tpu_custom_call.1']
    #allocation7 [shape = 'u8[4096]{0}', space=vmem, size = 0x1000, scoped, tag = 'output window, operand 0, single buffered']
    %8 = vsyncpa [#allocation3], 0
    %9 = vsyncpa [#allocation6], 0
    %10 = vsyncpa [#allocation4], 0
    // Predicated region
    $region2: #{tpu_custom_call.1} parent=1 // pred_check
      _
    $region3: #{tpu_custom_call.1} parent=1 // pred_check_branch
      %12 = sbr.rel (0) target = $region5
    $region4: #{tpu_custom_call.1} parent=1 // pred_region
      %14 = vsyncadd [#allocation3], 0
      %s16 = sshll.u32 %s0, 4
      %s17 = int_to_ptr.hbm [resolvable:$true] %s16
      %s18 = sshll.u32 [#allocation2], 4
      %s19 = int_to_ptr.vmem [resolvable:$true] %s18
      %21 = dma.hbm_to_vmem [thread:$0]  %s17, 128, %s19, [#allocation3]
    $region5: #{tpu_custom_call.1} parent=1 // pred_fallthru
      _
    // Predicated region
    $region6: #{tpu_custom_call.1} parent=1 // pred_check
      _
    $region7: #{tpu_custom_call.1} parent=1 // pred_check_branch
      %23 = sbr.rel (0) target = $region9
    $region8: #{tpu_custom_call.1} parent=1 // pred_region
      %25 = vsyncadd [#allocation6], 0
      %s26 = sshll.u32 %s1, 4
      %s27 = int_to_ptr.hbm [resolvable:$true] %s26
      %s28 = sshll.u32 [#allocation5], 4
      %s29 = int_to_ptr.vmem [resolvable:$true] %s28
      %34 = dma.hbm_to_vmem [thread:$0]  %s27, 512, %s29, [#allocation6], 128, 128, 8
    $region9: #{tpu_custom_call.1} parent=1 // pred_fallthru
      _
    // Predicated region
    $region10: #{tpu_custom_call.1} parent=1 // pred_check
      _
    $region11: #{tpu_custom_call.1} parent=1 // pred_check_branch
      %36 = sbr.rel (0) target = $region13
    $region12: #{tpu_custom_call.1} parent=1 // pred_region
      _
    $region13: #{tpu_custom_call.1} parent=1 // pred_fallthru
      _
    // Predicated region
    $region14: #{tpu_custom_call.1} parent=1 // pred_check
      _
    $region15: #{tpu_custom_call.1} parent=1 // pred_check_branch
      %38 = sbr.rel (0) target = $region17
    $region16: #{tpu_custom_call.1} parent=1 // pred_region
      %40 = dma.done [#allocation3], 128
    $region17: #{tpu_custom_call.1} parent=1 // pred_fallthru
      _
    // Predicated region
    $region18: #{tpu_custom_call.1} parent=1 // pred_check
      _
    $region19: #{tpu_custom_call.1} parent=1 // pred_check_branch
      %42 = sbr.rel (0) target = $region21
    $region20: #{tpu_custom_call.1} parent=1 // pred_region
      %44 = dma.done [#allocation6], 512
    $region21: #{tpu_custom_call.1} parent=1 // pred_fallthru
      _
    %v45 = vld [vmem:[#allocation2] sm:$0xff]
    %v46 = vld [vmem:[#allocation5] sm:$0xff]
    %v47 = vld [vmem:[#allocation5 + $0x8] sm:$0xff]
    %v48 = vld [vmem:[#allocation5 + $0x10] sm:$0xff]
    %v49 = vld [vmem:[#allocation5 + $0x18] sm:$0xff]
    %v50 = vld [vmem:[%s2] sm:$0x1]
    %v52 = vperm.slane %v50, 0
    %vm54 = vcmask 261120
    %v56 = vsel %vm54, %v45, 0
    %58 = vmatpush.msra.mxu0 0.0
    %59 = vmatpush.msra.mxu0 0.0
    %60 = vmatpush.msra.mxu0 0.0
    %61 = vmatpush.msra.mxu0 0.0
    %62 = vmatpush.msra.mxu0 0.0
    %63 = vmatpush.msra.mxu0 0.0
    %64 = vmatpush.msra.mxu0 0.0
    %65 = vmatpush.msra.mxu0 0.0
    %66 = vmatpush.msra.mxu0 0.0
    %67 = vmatpush.msra.mxu0 0.0
    %68 = vmatpush.msra.mxu0 0.0
    %69 = vmatpush.msra.mxu0 0.0
    %70 = vmatpush.msra.mxu0 %v49
    %71 = vmatpush.msra.mxu0 %v48
    %72 = vmatpush.msra.mxu0 %v47
    %73 = vmatpush.msra.mxu0 %v46
    %74 = vmatmul.f32.gmra.mxu0 %v56
    %v75 = vpop.f32.mrf.mxu0
    %v76 = vadd.f32 %v52, %v75
    %77 = vdwg.mxu0
    %78 = vst [vmem:[#allocation7] sm:$0xff] %v76
    // Predicated region
    $region22: #{tpu_custom_call.1} parent=1 // pred_check
      _
    $region23: #{tpu_custom_call.1} parent=1 // pred_check_branch
      %80 = sbr.rel (0) target = $region25
    $region24: #{tpu_custom_call.1} parent=1 // pred_region
      %82 = vsyncadd [#allocation4], 0
      %s84 = sshll.u32 [#allocation7], 4
      %s85 = int_to_ptr.vmem [resolvable:$true] %s84
      %s86 = sshll.u32 %s3, 4
      %s87 = int_to_ptr.hbm [resolvable:$true] %s86
      %89 = dma.vmem_to_hbm [thread:$0]  %s85, 128, %s87, [#allocation4]
    $region25: #{tpu_custom_call.1} parent=1 // pred_fallthru
      _
    // Predicated region
    $region26: #{tpu_custom_call.1} parent=1 // pred_check
      _
    $region27: #{tpu_custom_call.1} parent=1 // pred_check_branch
      %91 = sbr.rel (0) target = $region29
    $region28: #{tpu_custom_call.1} parent=1 // pred_region
      %93 = dma.done [#allocation4], 128
    $region29: #{tpu_custom_call.1} parent=1 // pred_fallthru
      _
    %94 = vsyncpa [#allocation3], 1
    %95 = vsyncpa [#allocation6], 1
    %96 = vsyncpa [#allocation4], 1

</llo_original>
